<compile_context>
chip_gen: v6e
topology: v6e:2x2x1
jax: 0.10.0
libtpu: 0.0.40
codegen_flags: <defaults>
</compile_context>

<pallas_src>
import jax
import jax.numpy as jnp
from jax.experimental import pallas as pl
from jax.experimental.pallas import tpu as pltpu

N_IN = 1 * 28 * 28      # 784
N_OUT = 10
N_PAD = 128             # lane-dense padded output width


def _round_up(a: int, m: int) -> int:
    return ((a + m - 1) // m) * m


def _choose_tb(B: int) -> int:
    """Batch tile size: full block for tiny batches, else >=2 grid steps, <=2048."""
    if B <= 8:
        return B                                  # block dims == full array dims
    half = _round_up(pl.cdiv(B, 2), 8)            # aim for >=2 steps (v7x megacore)
    return max(8, min(2048, half))


def mnist_fused_kernel(x_ref, w_ref, b_ref, out_ref):
    # x_ref : [TB, 784] bf16   w_ref : [784, 128] bf16
    # b_ref : [1, 128]  f32    out_ref: [TB, 128] f32
    # Fused affine layer: bf16 MXU matmul, f32 accumulate, f32 bias add.
    o = jnp.dot(x_ref[...], w_ref[...],
                preferred_element_type=jnp.float32) + b_ref[...]

    # Numerically stable log_softmax over the 128 lanes (f32).  Pad lanes sit
    # at ~-1e30, so exp(pad - m) == 0 and they do not perturb the normalizer.
    m = jnp.max(o, axis=-1, keepdims=True)
    shifted = o - m
    lse = jnp.log(jnp.sum(jnp.exp(shifted), axis=-1, keepdims=True))
    out_ref[...] = (shifted - lse).astype(out_ref.dtype)


def prepare_params(w1, b1, w2, b2):
    """One-time parameter prep (hoisted out of the forward path).

    Folds the two linears (exact because the reference ReLU is a no-op),
    pads the 10 output features to 128 lane-dense columns, and casts the
    fused weight to bf16.  Bias stays f32 (added after the f32-accumulated
    matmul)."""
    w_fused = jnp.dot(w1, w2)                     # [784, 10]  (fold in f32)
    b_fused = jnp.dot(b1, w2) + b2                # [1, 10]
    w_pad = (jnp.zeros((N_IN, N_PAD), jnp.float32)
             .at[:, :N_OUT].set(w_fused)).astype(jnp.bfloat16)
    b_pad = (jnp.full((1, N_PAD), -1e30, jnp.float32)
             .at[:, :N_OUT].set(b_fused))
    return w_pad, b_pad


def mnist_forward(x_nchw, w_pad, b_pad):
    """x_nchw: [B, 1, 28, 28].  Returns [B, 10] f32 log-probs.

    Intended to run under jax.jit so the trailing [:, :N_OUT] slice fuses."""
    B = x_nchw.shape[0]
    # Flatten (same as torch .view) and cast activations to bf16.
    x_flat = x_nchw.reshape(B, N_IN).astype(jnp.bfloat16)

    TB = _choose_tb(B)
    grid = (pl.cdiv(B, TB),)                      # ragged last block: no jnp.pad

    cost = pl.CostEstimate(
        flops=2 * B * N_IN * N_PAD,
        transcendentals=B * (N_PAD + 1),
        bytes_accessed=(B * N_IN * 2            # x  (bf16)
                        + B * N_PAD * 4          # out (f32)
                        + N_IN * N_PAD * 2       # fused W (bf16)
                        + N_PAD * 4),            # fused bias (f32)
    )

    out_padded = pl.pallas_call(
        mnist_fused_kernel,
        out_shape=jax.ShapeDtypeStruct((B, N_PAD), jnp.float32),
        grid=grid,
        in_specs=[
            pl.BlockSpec((TB, N_IN), lambda i: (i, 0)),     # x: tiled over batch
            pl.BlockSpec((N_IN, N_PAD), lambda i: (0, 0)),  # fused W: resident
            pl.BlockSpec((1, N_PAD), lambda i: (0, 0)),     # fused bias: resident
        ],
        out_specs=pl.BlockSpec((TB, N_PAD), lambda i: (i, 0)),
        compiler_params=pltpu.CompilerParams(
            dimension_semantics=("parallel",),
            vmem_limit_bytes=32 * 1024 * 1024,
        ),
        cost_estimate=cost,
    )(x_flat, w_pad, b_pad)

    # Under jit this slice fuses with the consumer (no standalone HBM copy).
    return out_padded[:, :N_OUT]


def init_params(key):
    """Deterministic synthetic params, PyTorch-Linear-style uniform init.

    Stored as (in_features, out_features), i.e. already transposed vs torch."""
    k1, k2, k3, k4 = jax.random.split(key, 4)
    bound1 = 1.0 / jnp.sqrt(784.0)
    bound2 = 1.0 / jnp.sqrt(28.0)
    w1 = jax.random.uniform(k1, (784, 28), jnp.float32, -bound1, bound1)
    b1 = jax.random.uniform(k2, (1, 28), jnp.float32, -bound1, bound1)
    w2 = jax.random.uniform(k3, (28, 10), jnp.float32, -bound2, bound2)
    b2 = jax.random.uniform(k4, (1, 10), jnp.float32, -bound2, bound2)
    return w1, b1, w2, b2


if __name__ == "__main__":
    key = jax.random.PRNGKey(0)
    k_x, k_p = jax.random.split(key)

    # Small batch, shape dictated by the module: [B, 1, 28, 28]
    x = jax.random.normal(k_x, (2, 1, 28, 28), jnp.float32)
    w1, b1, w2, b2 = init_params(k_p)

    # One-time param prep (fold + lane pad + bf16 cast), then a jitted forward.
    w_pad, b_pad = prepare_params(w1, b1, w2, b2)
    fwd = jax.jit(mnist_forward)

    out = fwd(x, w_pad, b_pad)
    out = jax.block_until_ready(out)

    # Reference forward of the PyTorch module (its F.relu result is discarded,
    # so ReLU is omitted here too), in full f32.  bf16 activations/weights in
    # the kernel give ~1e-3-level differences on the log-probs.
    x_flat = x.reshape(x.shape[0], -1)
    ref = jax.nn.log_softmax((x_flat @ w1 + b1) @ w2 + b2, axis=-1)
    assert out.shape == (2, 10)
    assert jnp.all(jnp.isfinite(out)), "non-finite log-probs"
    assert jnp.allclose(out, ref, atol=2e-2), "mismatch vs pure-JAX reference"

    print("KERNEL_OK")
</pallas_src>

<mosaic_0001>
module attributes {stable_mosaic.version = 11 : i64} {
  func.func @mnist_fused_kernel(%arg0: i32, %arg1: memref<2x784xbf16, #tpu.memory_space<vmem>>, %arg2: memref<784x128xbf16, #tpu.memory_space<vmem>>, %arg3: memref<1x128xf32, #tpu.memory_space<vmem>>, %arg4: memref<2x128xf32, #tpu.memory_space<vmem>>) attributes {dimension_semantics = [#tpu.dimension_semantics<parallel>], iteration_bounds = array<i64: 1>, scalar_prefetch = 0 : i64, scratch_operands = 0 : i64, tpu.core_type = #tpu.core_type<tc>, window_params = [{transform_indices = @transform_0, window_bounds = array<i64: 2, 784>}, {pipeline_mode = #tpu.pipeline_mode<synchronous>, transform_indices = @transform_1, window_bounds = array<i64: 784, 128>}, {pipeline_mode = #tpu.pipeline_mode<synchronous>, transform_indices = @transform_2, window_bounds = array<i64: 1, 128>}, {transform_indices = @transform_3, window_bounds = array<i64: 2, 128>}]} {
    %c0 = arith.constant 0 : index
    %c0_0 = arith.constant 0 : index
    %0 = vector.load %arg1[%c0, %c0_0] : memref<2x784xbf16, #tpu.memory_space<vmem>>, vector<2x784xbf16>
    %c0_1 = arith.constant 0 : index
    %c0_2 = arith.constant 0 : index
    %1 = vector.load %arg2[%c0_1, %c0_2] : memref<784x128xbf16, #tpu.memory_space<vmem>>, vector<784x128xbf16>
    %cst = arith.constant dense<0.000000e+00> : vector<2x128xf32>
    %2 = tpu.matmul %0, %1, %cst {dimension_numbers = #tpu.dot_dimension_numbers<[1], [0], [0], [1], [0, 0, 1, 1], [], []>} : vector<2x784xbf16>, vector<784x128xbf16>, vector<2x128xf32> -> vector<2x128xf32>
    %c0_3 = arith.constant 0 : index
    %c0_4 = arith.constant 0 : index
    %3 = vector.load %arg3[%c0_3, %c0_4] : memref<1x128xf32, #tpu.memory_space<vmem>>, vector<1x128xf32>
    %4 = vector.broadcast %3 : vector<1x128xf32> to vector<2x128xf32>
    %5 = arith.addf %2, %4 : vector<2x128xf32>
    %cst_5 = arith.constant dense<0xFF800000> : vector<2xf32>
    %6 = vector.multi_reduction <maximumf>, %5, %cst_5 [1] : vector<2x128xf32> to vector<2xf32>
    %7 = vector.shape_cast %6 : vector<2xf32> to vector<2x1xf32>
    %8 = vector.broadcast %7 : vector<2x1xf32> to vector<2x128xf32>
    %9 = arith.subf %5, %8 : vector<2x128xf32>
    %10 = math.exp %9 : vector<2x128xf32>
    %cst_6 = arith.constant dense<0.000000e+00> : vector<2xf32>
    %11 = vector.multi_reduction <add>, %10, %cst_6 [1] : vector<2x128xf32> to vector<2xf32>
    %12 = vector.shape_cast %11 : vector<2xf32> to vector<2x1xf32>
    %13 = math.log %12 : vector<2x1xf32>
    %14 = vector.broadcast %13 : vector<2x1xf32> to vector<2x128xf32>
    %15 = arith.subf %9, %14 : vector<2x128xf32>
    %c0_7 = arith.constant 0 : index
    %c0_8 = arith.constant 0 : index
    %16 = vector.load %arg4[%c0_7, %c0_8] : memref<2x128xf32, #tpu.memory_space<vmem>>, vector<2x128xf32>
    tpu.vector_store %arg4[%c0_7, %c0_8], %15 {strides = array<i32>} : memref<2x128xf32, #tpu.memory_space<vmem>>, vector<2x128xf32>,
    return
  }
  func.func @transform_0(%arg0: i32) -> (i32, i32) {
    %c0_i32 = arith.constant 0 : i32
    %c0_i32_0 = arith.constant 0 : i32
    return %arg0, %c0_i32 : i32, i32
  }
  func.func @transform_1(%arg0: i32) -> (i32, i32) {
    %c0_i32 = arith.constant 0 : i32
    %c0_i32_0 = arith.constant 0 : i32
    %c0_i32_1 = arith.constant 0 : i32
    return %c0_i32, %c0_i32_0 : i32, i32
  }
  func.func @transform_2(%arg0: i32) -> (i32, i32) {
    %c0_i32 = arith.constant 0 : i32
    %c0_i32_0 = arith.constant 0 : i32
    %c0_i32_1 = arith.constant 0 : i32
    return %c0_i32, %c0_i32_0 : i32, i32
  }
  func.func @transform_3(%arg0: i32) -> (i32, i32) {
    %c0_i32 = arith.constant 0 : i32
    %c0_i32_0 = arith.constant 0 : i32
    return %arg0, %c0_i32 : i32, i32
  }
}

</mosaic_0001>

<llo_original>
// kernel: mnist_forward.1
$region0: #{mnist_forward.1}
  #allocation0 [shape = 'u32[]', space=smem, size = 0x4, offset = 0x4, fixed_abs, tag = 'smem constant byte address 0x4 - core index']
  #allocation1 [shape = 'u32[144,128]{1,0:T(1,128)}', space=vmem, size = 0x12000, scoped, tag = 'internal scratch']
  %s0 = inlined_call_operand.vmem [shape: bf16[2,784], index: 0, kind: input, shape index: {}]
  %s1 = inlined_call_operand.hbm [shape: bf16[784,128], index: 1, kind: input, shape index: {}]
  %s2 = inlined_call_operand.vmem [shape: f32[1,128], index: 2, kind: input, shape index: {}]
  %s3 = inlined_call_operand.hbm [shape: f32[2,128], index: 3, kind: output, shape index: {}]
  %s4 = sld [smem:[#allocation0]]
  $region26: #{mnist_forward.1} parent=0
    _
  %s6 = ssub.s32 1, %s4
  %s7 = scalar_select 0, %s6, %s4
  $region1: #{mnist_forward.1} parent=0
    #allocation2 [shape = 'u8[200704]{0}', space=vmem, size = 0x31000, scoped, tag = 'input window, operand 1, single buffered']
    #allocation3 [shape = 's32[1]{0}', space=sflag, size = 0x4, scoped, tag = 'scoped memory for mnist_forward.1']
    #allocation4 [shape = 's32[1]{0}', space=sflag, size = 0x4, scoped, tag = 'scoped memory for mnist_forward.1']
    #allocation5 [shape = 'u8[1024]{0}', space=vmem, size = 0x400, scoped, tag = 'output window, operand 0, single buffered']
    %8 = vsyncpa [#allocation3], 0
    %9 = vsyncpa [#allocation4], 0
    // Predicated region
    $region2: #{mnist_forward.1} parent=1 // pred_check
      _
    $region3: #{mnist_forward.1} parent=1 // pred_check_branch
      %11 = sbr.rel (0) target = $region5
    $region4: #{mnist_forward.1} parent=1 // pred_region
      _
    $region5: #{mnist_forward.1} parent=1 // pred_fallthru
      _
    // Predicated region
    $region6: #{mnist_forward.1} parent=1 // pred_check
      _
    $region7: #{mnist_forward.1} parent=1 // pred_check_branch
      %13 = sbr.rel (0) target = $region9
    $region8: #{mnist_forward.1} parent=1 // pred_region
      %s15 = ssub.s32 6272, 6272
      %16 = vsyncadd [#allocation3], %s15
      %s17 = sshll.u32 [#allocation2], 4
      %s18 = int_to_ptr.vmem [resolvable:$true] %s17
      %23 = dma.hbm_to_vmem [thread:$0]  %s1, 6272, %s18, [#allocation3], 64, 64, 4
    $region9: #{mnist_forward.1} parent=1 // pred_fallthru
      _
    // Predicated region
    $region10: #{mnist_forward.1} parent=1 // pred_check
      _
    $region11: #{mnist_forward.1} parent=1 // pred_check_branch
      %25 = sbr.rel (0) target = $region13
    $region12: #{mnist_forward.1} parent=1 // pred_region
      _
    $region13: #{mnist_forward.1} parent=1 // pred_fallthru
      _
    // Predicated region
    $region14: #{mnist_forward.1} parent=1 // pred_check
      _
    $region15: #{mnist_forward.1} parent=1 // pred_check_branch
      %27 = sbr.rel (0) target = $region17
    $region16: #{mnist_forward.1} parent=1 // pred_region
      %28 = dma.done [#allocation3], 6272
    $region17: #{mnist_forward.1} parent=1 // pred_fallthru
      _
    %v30 = vld [vmem:[%s0] sm:$0x7f]
    %v31 = vld [vmem:[#allocation2] sm:$0xf]
    %v32 = vld [vmem:[#allocation2 + $0x4] sm:$0xf]
    %v33 = vld [vmem:[#allocation2 + $0x8] sm:$0xf]
    %v34 = vld [vmem:[#allocation2 + $0xc] sm:$0xf]
    %v35 = vld [vmem:[#allocation2 + $0x10] sm:$0xf]
    %v36 = vld [vmem:[#allocation2 + $0x14] sm:$0xf]
    %v37 = vld [vmem:[#allocation2 + $0x18] sm:$0xf]
    %v38 = vld [vmem:[#allocation2 + $0x1c] sm:$0xf]
    %v39 = vld [vmem:[#allocation2 + $0x20] sm:$0xf]
    %v40 = vld [vmem:[#allocation2 + $0x24] sm:$0xf]
    %v41 = vld [vmem:[#allocation2 + $0x28] sm:$0xf]
    %v42 = vld [vmem:[#allocation2 + $0x2c] sm:$0xf]
    %v43 = vld [vmem:[#allocation2 + $0x30] sm:$0xf]
    %v44 = vld [vmem:[#allocation2 + $0x34] sm:$0xf]
    %v45 = vld [vmem:[#allocation2 + $0x38] sm:$0xf]
    %v46 = vld [vmem:[#allocation2 + $0x3c] sm:$0xf]
    %v47 = vld [vmem:[#allocation2 + $0x40] sm:$0xf]
    %v48 = vld [vmem:[#allocation2 + $0x44] sm:$0xf]
    %v49 = vld [vmem:[#allocation2 + $0x48] sm:$0xf]
    %v50 = vld [vmem:[#allocation2 + $0x4c] sm:$0xf]
    %v51 = vld [vmem:[#allocation2 + $0x50] sm:$0xf]
    %v52 = vld [vmem:[#allocation2 + $0x54] sm:$0xf]
    %v53 = vld [vmem:[#allocation2 + $0x58] sm:$0xf]
    %v54 = vld [vmem:[#allocation2 + $0x5c] sm:$0xf]
    %v55 = vld [vmem:[#allocation2 + $0x60] sm:$0xf]
    %v56 = vld [vmem:[#allocation2 + $0x64] sm:$0xf]
    %v57 = vld [vmem:[#allocation2 + $0x68] sm:$0xf]
    %v58 = vld [vmem:[#allocation2 + $0x6c] sm:$0xf]
    %v59 = vld [vmem:[#allocation2 + $0x70] sm:$0xf]
    %v60 = vld [vmem:[#allocation2 + $0x74] sm:$0xf]
    %v61 = vld [vmem:[#allocation2 + $0x78] sm:$0xf]
    %v62 = vld [vmem:[#allocation2 + $0x7c] sm:$0xf]
    %v63 = vld [vmem:[#allocation2 + $0x80] sm:$0xf]
    %v64 = vld [vmem:[#allocation2 + $0x84] sm:$0xf]
    %v65 = vld [vmem:[#allocation2 + $0x88] sm:$0xf]
    %v66 = vld [vmem:[#allocation2 + $0x8c] sm:$0xf]
    %v67 = vld [vmem:[#allocation2 + $0x90] sm:$0xf]
    %v68 = vld [vmem:[#allocation2 + $0x94] sm:$0xf]
    %v69 = vld [vmem:[#allocation2 + $0x98] sm:$0xf]
    %v70 = vld [vmem:[#allocation2 + $0x9c] sm:$0xf]
    %v71 = vld [vmem:[#allocation2 + $0xa0] sm:$0xf]
    %v72 = vld [vmem:[#allocation2 + $0xa4] sm:$0xf]
    %v73 = vld [vmem:[#allocation2 + $0xa8] sm:$0xf]
    %v74 = vld [vmem:[#allocation2 + $0xac] sm:$0xf]
    %v75 = vld [vmem:[#allocation2 + $0xb0] sm:$0xf]
    %v76 = vld [vmem:[#allocation2 + $0xb4] sm:$0xf]
    %v77 = vld [vmem:[#allocation2 + $0xb8] sm:$0xf]
    %v78 = vld [vmem:[#allocation2 + $0xbc] sm:$0xf]
    %v79 = vld [vmem:[#allocation2 + $0xc0] sm:$0xf]
    %v80 = vld [vmem:[#allocation2 + $0xc4] sm:$0xf]
    %v81 = vld [vmem:[#allocation2 + $0xc8] sm:$0xf]
    %v82 = vld [vmem:[#allocation2 + $0xcc] sm:$0xf]
    %v83 = vld [vmem:[#allocation2 + $0xd0] sm:$0xf]
    %v84 = vld [vmem:[#allocation2 + $0xd4] sm:$0xf]
    %v85 = vld [vmem:[#allocation2 + $0xd8] sm:$0xf]
    %v86 = vld [vmem:[#allocation2 + $0xdc] sm:$0xf]
    %v87 = vld [vmem:[#allocation2 + $0xe0] sm:$0xf]
    %v88 = vld [vmem:[#allocation2 + $0xe4] sm:$0xf]
    %v89 = vld [vmem:[#allocation2 + $0xe8] sm:$0xf]
    %v90 = vld [vmem:[#allocation2 + $0xec] sm:$0xf]
    %v91 = vld [vmem:[#allocation2 + $0xf0] sm:$0xf]
    %v92 = vld [vmem:[#allocation2 + $0xf4] sm:$0xf]
    %v93 = vld [vmem:[#allocation2 + $0xf8] sm:$0xf]
    %v94 = vld [vmem:[#allocation2 + $0xfc] sm:$0xf]
    %v95 = vld [vmem:[#allocation2 + $0x100] sm:$0xf]
    %v96 = vld [vmem:[#allocation2 + $0x104] sm:$0xf]
    %v97 = vld [vmem:[#allocation2 + $0x108] sm:$0xf]
    %v98 = vld [vmem:[#allocation2 + $0x10c] sm:$0xf]
    %v99 = vld [vmem:[#allocation2 + $0x110] sm:$0xf]
    %v100 = vld [vmem:[#allocation2 + $0x114] sm:$0xf]
    %v101 = vld [vmem:[#allocation2 + $0x118] sm:$0xf]
    %v102 = vld [vmem:[#allocation2 + $0x11c] sm:$0xf]
    %v103 = vld [vmem:[#allocation2 + $0x120] sm:$0xf]
    %v104 = vld [vmem:[#allocation2 + $0x124] sm:$0xf]
    %v105 = vld [vmem:[#allocation2 + $0x128] sm:$0xf]
    %v106 = vld [vmem:[#allocation2 + $0x12c] sm:$0xf]
    %v107 = vld [vmem:[#allocation2 + $0x130] sm:$0xf]
    %v108 = vld [vmem:[#allocation2 + $0x134] sm:$0xf]
    %v109 = vld [vmem:[#allocation2 + $0x138] sm:$0xf]
    %v110 = vld [vmem:[#allocation2 + $0x13c] sm:$0xf]
    %v111 = vld [vmem:[#allocation2 + $0x140] sm:$0xf]
    %v112 = vld [vmem:[#allocation2 + $0x144] sm:$0xf]
    %v113 = vld [vmem:[#allocation2 + $0x148] sm:$0xf]
    %v114 = vld [vmem:[#allocation2 + $0x14c] sm:$0xf]
    %v115 = vld [vmem:[#allocation2 + $0x150] sm:$0xf]
    %v116 = vld [vmem:[#allocation2 + $0x154] sm:$0xf]
    %v117 = vld [vmem:[#allocation2 + $0x158] sm:$0xf]
    %v118 = vld [vmem:[#allocation2 + $0x15c] sm:$0xf]
    %v119 = vld [vmem:[#allocation2 + $0x160] sm:$0xf]
    %v120 = vld [vmem:[#allocation2 + $0x164] sm:$0xf]
    %v121 = vld [vmem:[#allocation2 + $0x168] sm:$0xf]
    %v122 = vld [vmem:[#allocation2 + $0x16c] sm:$0xf]
    %v123 = vld [vmem:[#allocation2 + $0x170] sm:$0xf]
    %v124 = vld [vmem:[#allocation2 + $0x174] sm:$0xf]
    %v125 = vld [vmem:[#allocation2 + $0x178] sm:$0xf]
    %v126 = vld [vmem:[#allocation2 + $0x17c] sm:$0xf]
    %v127 = vld [vmem:[#allocation2 + $0x180] sm:$0xf]
    %v128 = vld [vmem:[#allocation2 + $0x184] sm:$0xf]
    %v129 = vld [vmem:[%s2] sm:$0x1]
    %v131 = vlaneseq
    %v132 = vshrl.u32 %v131, 7
    %v133 = vsub.s32 0, %v132
    %v134 = vrot.slane %v129, %v133
    %v137 = vcombine.high %v30, %v30
    %v139 = vunpack.c.l.s4 1966171168
    %v140 = vunpack.c.0.s8 %v139
    %v141 = vlaneseq
    %v142 = vshrl.u32 %v141, 7
    %v143 = vsub.s32 %v140, %v142
    %v144 = vrot.slane %v30, %v143
    %v146 = vunpack.c.l.s4 1966171168
    %v147 = vunpack.c.0.s8 %v146
    %v148 = vlaneseq
    %v149 = vshrl.u32 %v148, 7
    %v150 = vsub.s32 %v147, %v149
    %v151 = vrot.slane %v137, %v150
    %v152 = vcombine.high %v144, %v144
    %v153 = vcombine.high %v151, %v151
    %v155 = vunpack.c.l.s4 1966171168
    %v156 = vunpack.c.0.s8 %v155
    %v157 = vlaneseq
    %v158 = vshrl.u32 %v157, 7
    %v159 = vsub.s32 %v156, %v158
    %v160 = vrot.slane %v144, %v159
    %v162 = vunpack.c.l.s4 1966171168
    %v163 = vunpack.c.0.s8 %v162
    %v164 = vlaneseq
    %v165 = vshrl.u32 %v164, 7
    %v166 = vsub.s32 %v163, %v165
    %v167 = vrot.slane %v151, %v166
    %v169 = vunpack.c.l.s4 1966171168
    %v170 = vunpack.c.0.s8 %v169
    %v171 = vlaneseq
    %v172 = vshrl.u32 %v171, 7
    %v173 = vsub.s32 %v170, %v172
    %v174 = vrot.slane %v152, %v173
    %v176 = vunpack.c.l.s4 1966171168
    %v177 = vunpack.c.0.s8 %v176
    %v178 = vlaneseq
    %v179 = vshrl.u32 %v178, 7
    %v180 = vsub.s32 %v177, %v179
    %v181 = vrot.slane %v153, %v180
    %v182 = vcombine.high %v160, %v160
    %v183 = vcombine.high %v167, %v167
    %v184 = vcombine.high %v174, %v174
    %v289 = vunpack.c.l.b16 %v31
    %v290 = vunpack.c.l.b16 %v32
    %v291 = vunpack.c.l.b16 %v33
    %v292 = vunpack.c.l.b16 %v34
    %v293 = vunpack.c.l.b16 %v35
    %v294 = vunpack.c.l.b16 %v36
    %v295 = vunpack.c.l.b16 %v37
    %v296 = vunpack.c.l.b16 %v38
    %v297 = vunpack.c.l.b16 %v39
    %v298 = vunpack.c.l.b16 %v40
    %v299 = vunpack.c.l.b16 %v41
    %v300 = vunpack.c.l.b16 %v42
    %v301 = vunpack.c.l.b16 %v43
    %v302 = vunpack.c.l.b16 %v44
    %v303 = vunpack.c.l.b16 %v45
    %v304 = vunpack.c.l.b16 %v46
    %v305 = vunpack.c.l.b16 %v47
    %v306 = vunpack.c.l.b16 %v48
    %v307 = vunpack.c.l.b16 %v49
    %v308 = vunpack.c.l.b16 %v50
    %v309 = vunpack.c.l.b16 %v51
    %v310 = vunpack.c.l.b16 %v52
    %v311 = vunpack.c.l.b16 %v53
    %v312 = vunpack.c.l.b16 %v54
    %v313 = vunpack.c.l.b16 %v55
    %v314 = vunpack.c.l.b16 %v56
    %v315 = vunpack.c.l.b16 %v57
    %v316 = vunpack.c.l.b16 %v58
    %v317 = vunpack.c.l.b16 %v59
    %v318 = vunpack.c.l.b16 %v60
    %v319 = vunpack.c.l.b16 %v61
    %v320 = vunpack.c.l.b16 %v62
    %v321 = vunpack.c.l.b16 %v63
    %v322 = vunpack.c.l.b16 %v64
    %v323 = vunpack.c.l.b16 %v65
    %v324 = vunpack.c.l.b16 %v66
    %v325 = vunpack.c.l.b16 %v67
    %v326 = vunpack.c.l.b16 %v68
    %v327 = vunpack.c.l.b16 %v69
    %v328 = vunpack.c.l.b16 %v70
    %v329 = vunpack.c.l.b16 %v71
    %v330 = vunpack.c.l.b16 %v72
    %v331 = vunpack.c.l.b16 %v73
    %v332 = vunpack.c.l.b16 %v74
    %v333 = vunpack.c.l.b16 %v75
    %v334 = vunpack.c.l.b16 %v76
    %v335 = vunpack.c.l.b16 %v77
    %v336 = vunpack.c.l.b16 %v78
    %v337 = vunpack.c.l.b16 %v79
    %v338 = vunpack.c.l.b16 %v80
    %v339 = vunpack.c.l.b16 %v81
    %v340 = vunpack.c.l.b16 %v82
    %v341 = vunpack.c.l.b16 %v83
    %v342 = vunpack.c.l.b16 %v84
    %v343 = vunpack.c.l.b16 %v85
    %v344 = vunpack.c.l.b16 %v86
    %v345 = vunpack.c.l.b16 %v87
    %v346 = vunpack.c.l.b16 %v88
    %v347 = vunpack.c.l.b16 %v89
    %v348 = vunpack.c.l.b16 %v90
    %v349 = vunpack.c.l.b16 %v91
    %v350 = vunpack.c.l.b16 %v92
    %v351 = vunpack.c.l.b16 %v93
    %v352 = vunpack.c.l.b16 %v94
    %v353 = vunpack.c.l.b16 %v95
    %v354 = vunpack.c.l.b16 %v96
    %v355 = vunpack.c.l.b16 %v97
    %v356 = vunpack.c.l.b16 %v98
    %v357 = vunpack.c.l.b16 %v99
    %v358 = vunpack.c.l.b16 %v100
    %v359 = vunpack.c.l.b16 %v101
    %v360 = vunpack.c.l.b16 %v102
    %v361 = vunpack.c.l.b16 %v103
    %v362 = vunpack.c.l.b16 %v104
    %v363 = vunpack.c.l.b16 %v105
    %v364 = vunpack.c.l.b16 %v106
    %v365 = vunpack.c.l.b16 %v107
    %v366 = vunpack.c.l.b16 %v108
    %v367 = vunpack.c.l.b16 %v109
    %v368 = vunpack.c.l.b16 %v110
    %v369 = vunpack.c.l.b16 %v111
    %v370 = vunpack.c.l.b16 %v112
    %v371 = vunpack.c.l.b16 %v113
    %v372 = vunpack.c.l.b16 %v114
    %v373 = vunpack.c.l.b16 %v115
    %v374 = vunpack.c.l.b16 %v116
    %v375 = vunpack.c.l.b16 %v117
    %v376 = vunpack.c.l.b16 %v118
    %v377 = vunpack.c.l.b16 %v119
    %v378 = vunpack.c.l.b16 %v120
    %v379 = vunpack.c.l.b16 %v121
    %v380 = vunpack.c.l.b16 %v122
    %v381 = vunpack.c.l.b16 %v123
    %v382 = vunpack.c.l.b16 %v124
    %v383 = vunpack.c.l.b16 %v125
    %v384 = vunpack.c.l.b16 %v126
    %v385 = vunpack.c.l.b16 %v127
    %v386 = vunpack.c.l.b16 %v128
    %v387 = vpack.c.b16 %v290, %v289
    %v388 = vpack.c.b16 %v292, %v291
    %v389 = vpack.c.b16 %v294, %v293
    %v390 = vpack.c.b16 %v296, %v295
    %v391 = vpack.c.b16 %v298, %v297
    %v392 = vpack.c.b16 %v300, %v299
    %v393 = vpack.c.b16 %v302, %v301
    %v394 = vpack.c.b16 %v304, %v303
    %v395 = vpack.c.b16 %v306, %v305
    %v396 = vpack.c.b16 %v308, %v307
    %v397 = vpack.c.b16 %v310, %v309
    %v398 = vpack.c.b16 %v312, %v311
    %v399 = vpack.c.b16 %v314, %v313
    %v400 = vpack.c.b16 %v316, %v315
    %v401 = vpack.c.b16 %v318, %v317
    %v402 = vpack.c.b16 %v320, %v319
    %v403 = vpack.c.b16 %v322, %v321
    %v404 = vpack.c.b16 %v324, %v323
    %v405 = vpack.c.b16 %v326, %v325
    %v406 = vpack.c.b16 %v328, %v327
    %v407 = vpack.c.b16 %v330, %v329
    %v408 = vpack.c.b16 %v332, %v331
    %v409 = vpack.c.b16 %v334, %v333
    %v410 = vpack.c.b16 %v336, %v335
    %v411 = vpack.c.b16 %v338, %v337
    %v412 = vpack.c.b16 %v340, %v339
    %v413 = vpack.c.b16 %v342, %v341
    %v414 = vpack.c.b16 %v344, %v343
    %v415 = vpack.c.b16 %v346, %v345
    %v416 = vpack.c.b16 %v348, %v347
    %v417 = vpack.c.b16 %v350, %v349
    %v418 = vpack.c.b16 %v352, %v351
    %v419 = vpack.c.b16 %v354, %v353
    %v420 = vpack.c.b16 %v356, %v355
    %v421 = vpack.c.b16 %v358, %v357
    %v422 = vpack.c.b16 %v360, %v359
    %v423 = vpack.c.b16 %v362, %v361
    %v424 = vpack.c.b16 %v364, %v363
    %v425 = vpack.c.b16 %v366, %v365
    %v426 = vpack.c.b16 %v368, %v367
    %v427 = vpack.c.b16 %v370, %v369
    %v428 = vpack.c.b16 %v372, %v371
    %v429 = vpack.c.b16 %v374, %v373
    %v430 = vpack.c.b16 %v376, %v375
    %v431 = vpack.c.b16 %v378, %v377
    %v432 = vpack.c.b16 %v380, %v379
    %v433 = vpack.c.b16 %v382, %v381
    %v434 = vpack.c.b16 %v384, %v383
    %v435 = vpack.c.b16 %v386, %v385
    %vm485 = vcmask 130048
    %v487 = vsel %vm485, %v183, 0
    %489 = vmatprep.subr.bf16.mxu0 0
    %490 = vmatpush1.bf16.msra.mxu0 %v394
    %491 = vmatprep.subr.bf16.mxu0 0
    %492 = vmatpush1.bf16.msra.mxu0 %v393
    %493 = vmatprep.subr.bf16.mxu0 0
    %494 = vmatpush1.bf16.msra.mxu0 %v392
    %495 = vmatprep.subr.bf16.mxu0 0
    %496 = vmatpush1.bf16.msra.mxu0 %v391
    %497 = vmatprep.subr.bf16.mxu0 0
    %498 = vmatpush1.bf16.msra.mxu0 %v390
    %499 = vmatprep.subr.bf16.mxu0 0
    %500 = vmatpush1.bf16.msra.mxu0 %v389
    %501 = vmatprep.subr.bf16.mxu0 0
    %502 = vmatpush1.bf16.msra.mxu0 %v388
    %503 = vmatprep.subr.bf16.mxu0 0
    %504 = vmatpush1.bf16.msra.mxu0 %v387
    %505 = vmatprep.subr.bf16.mxu0 0
    %506 = vmatpush2.bf16.msra.mxu0 %v402
    %507 = vmatprep.subr.bf16.mxu0 0
    %508 = vmatpush2.bf16.msra.mxu0 %v401
    %509 = vmatprep.subr.bf16.mxu0 0
    %510 = vmatpush2.bf16.msra.mxu0 %v400
    %511 = vmatprep.subr.bf16.mxu0 0
    %512 = vmatpush2.bf16.msra.mxu0 %v399
    %513 = vmatprep.subr.bf16.mxu0 0
    %514 = vmatpush2.bf16.msra.mxu0 %v398
    %515 = vmatprep.subr.bf16.mxu0 0
    %516 = vmatpush2.bf16.msra.mxu0 %v397
    %517 = vmatprep.subr.bf16.mxu0 0
    %518 = vmatpush2.bf16.msra.mxu0 %v396
    %519 = vmatprep.subr.bf16.mxu0 0
    %520 = vmatpush2.bf16.msra.mxu0 %v395
    %521 = vmatprep.mubr.bf16.mxu0 %v174
    %522 = vmatmul.mubr.bf16.gmra.mxu0 %v160
    %v523 = vpop.f32.mrf.mxu0
    %v524 = vadd.f32 %v134, %v523
    %v525 = vpop.f32.mrf.mxu0
    %v526 = vpop.f32.mrf.mxu0
    %v527 = vpop.f32.mrf.mxu0
    %528 = vdwg.mxu0
    %529 = vmatprep.subr.bf16.mxu0 0
    %530 = vmatpush1.bf16.msra.mxu0 %v410
    %531 = vmatprep.subr.bf16.mxu0 0
    %532 = vmatpush1.bf16.msra.mxu0 %v409
    %533 = vmatprep.subr.bf16.mxu0 0
    %534 = vmatpush1.bf16.msra.mxu0 %v408
    %535 = vmatprep.subr.bf16.mxu0 0
    %536 = vmatpush1.bf16.msra.mxu0 %v407
    %537 = vmatprep.subr.bf16.mxu0 0
    %538 = vmatpush1.bf16.msra.mxu0 %v406
    %539 = vmatprep.subr.bf16.mxu0 0
    %540 = vmatpush1.bf16.msra.mxu0 %v405
    %541 = vmatprep.subr.bf16.mxu0 0
    %542 = vmatpush1.bf16.msra.mxu0 %v404
    %543 = vmatprep.subr.bf16.mxu0 0
    %544 = vmatpush1.bf16.msra.mxu0 %v403
    %545 = vmatprep.subr.bf16.mxu0 0
    %546 = vmatpush2.bf16.msra.mxu0 %v418
    %547 = vmatprep.subr.bf16.mxu0 0
    %548 = vmatpush2.bf16.msra.mxu0 %v417
    %549 = vmatprep.subr.bf16.mxu0 0
    %550 = vmatpush2.bf16.msra.mxu0 %v416
    %551 = vmatprep.subr.bf16.mxu0 0
    %552 = vmatpush2.bf16.msra.mxu0 %v415
    %553 = vmatprep.subr.bf16.mxu0 0
    %554 = vmatpush2.bf16.msra.mxu0 %v414
    %555 = vmatprep.subr.bf16.mxu0 0
    %556 = vmatpush2.bf16.msra.mxu0 %v413
    %557 = vmatprep.subr.bf16.mxu0 0
    %558 = vmatpush2.bf16.msra.mxu0 %v412
    %559 = vmatprep.subr.bf16.mxu0 0
    %560 = vmatpush2.bf16.msra.mxu0 %v411
    %561 = vmatprep.mubr.bf16.mxu0 %v184
    %562 = vmatmul.mubr.bf16.gmra.mxu0 %v182
    %v563 = vpop.f32.mrf.mxu0
    %v564 = vadd.f32 %v524, %v563
    %v565 = vpop.f32.mrf.mxu0
    %v566 = vpop.f32.mrf.mxu0
    %v567 = vpop.f32.mrf.mxu0
    %568 = vdwg.mxu0
    %569 = vmatprep.subr.bf16.mxu0 0
    %570 = vmatpush1.bf16.msra.mxu0 %v426
    %571 = vmatprep.subr.bf16.mxu0 0
    %572 = vmatpush1.bf16.msra.mxu0 %v425
    %573 = vmatprep.subr.bf16.mxu0 0
    %574 = vmatpush1.bf16.msra.mxu0 %v424
    %575 = vmatprep.subr.bf16.mxu0 0
    %576 = vmatpush1.bf16.msra.mxu0 %v423
    %577 = vmatprep.subr.bf16.mxu0 0
    %578 = vmatpush1.bf16.msra.mxu0 %v422
    %579 = vmatprep.subr.bf16.mxu0 0
    %580 = vmatpush1.bf16.msra.mxu0 %v421
    %581 = vmatprep.subr.bf16.mxu0 0
    %582 = vmatpush1.bf16.msra.mxu0 %v420
    %583 = vmatprep.subr.bf16.mxu0 0
    %584 = vmatpush1.bf16.msra.mxu0 %v419
    %585 = vmatprep.subr.bf16.mxu0 0
    %586 = vmatpush2.bf16.msra.mxu0 %v434
    %587 = vmatprep.subr.bf16.mxu0 0
    %588 = vmatpush2.bf16.msra.mxu0 %v433
    %589 = vmatprep.subr.bf16.mxu0 0
    %590 = vmatpush2.bf16.msra.mxu0 %v432
    %591 = vmatprep.subr.bf16.mxu0 0
    %592 = vmatpush2.bf16.msra.mxu0 %v431
    %593 = vmatprep.subr.bf16.mxu0 0
    %594 = vmatpush2.bf16.msra.mxu0 %v430
    %595 = vmatprep.subr.bf16.mxu0 0
    %596 = vmatpush2.bf16.msra.mxu0 %v429
    %597 = vmatprep.subr.bf16.mxu0 0
    %598 = vmatpush2.bf16.msra.mxu0 %v428
    %599 = vmatprep.subr.bf16.mxu0 0
    %600 = vmatpush2.bf16.msra.mxu0 %v427
    %601 = vmatprep.mubr.bf16.mxu0 %v181
    %602 = vmatmul.mubr.bf16.gmra.mxu0 %v167
    %v603 = vpop.f32.mrf.mxu0
    %v604 = vadd.f32 %v564, %v603
    %v605 = vpop.f32.mrf.mxu0
    %v606 = vpop.f32.mrf.mxu0
    %v607 = vpop.f32.mrf.mxu0
    %608 = vdwg.mxu0
    %609 = vmatprep.subr.bf16.mxu0 0
    %610 = vmatpush1.bf16.msra.mxu0 0
    %611 = vmatprep.subr.bf16.mxu0 0
    %612 = vmatpush1.bf16.msra.mxu0 0
    %613 = vmatprep.subr.bf16.mxu0 0
    %614 = vmatpush1.bf16.msra.mxu0 0
    %615 = vmatprep.subr.bf16.mxu0 0
    %616 = vmatpush1.bf16.msra.mxu0 0
    %617 = vmatprep.subr.bf16.mxu0 0
    %618 = vmatpush1.bf16.msra.mxu0 0
    %619 = vmatprep.subr.bf16.mxu0 0
    %620 = vmatpush1.bf16.msra.mxu0 0
    %621 = vmatprep.subr.bf16.mxu0 0
    %622 = vmatpush1.bf16.msra.mxu0 0
    %623 = vmatprep.subr.bf16.mxu0 0
    %624 = vmatpush1.bf16.msra.mxu0 %v435
    %625 = vmatprep.subr.bf16.mxu0 0
    %626 = vmatpush2.bf16.msra.mxu0 0
    %627 = vmatprep.subr.bf16.mxu0 0
    %628 = vmatpush2.bf16.msra.mxu0 0
    %629 = vmatprep.subr.bf16.mxu0 0
    %630 = vmatpush2.bf16.msra.mxu0 0
    %631 = vmatprep.subr.bf16.mxu0 0
    %632 = vmatpush2.bf16.msra.mxu0 0
    %633 = vmatprep.subr.bf16.mxu0 0
    %634 = vmatpush2.bf16.msra.mxu0 0
    %635 = vmatprep.subr.bf16.mxu0 0
    %636 = vmatpush2.bf16.msra.mxu0 0
    %637 = vmatprep.subr.bf16.mxu0 0
    %638 = vmatpush2.bf16.msra.mxu0 0
    %639 = vmatprep.subr.bf16.mxu0 0
    %640 = vmatpush2.bf16.msra.mxu0 0
    %641 = vmatprep.mubr.bf16.mxu0 0
    %642 = vmatmul.mubr.bf16.gmra.mxu0 %v487
    %v643 = vpop.f32.mrf.mxu0
    %v644 = vadd.f32 %v604, %v643
    %v645 = vpop.f32.mrf.mxu0
    %v646 = vpop.f32.mrf.mxu0
    %v647 = vpop.f32.mrf.mxu0
    %648 = vdwg.mxu0
    %vm649 = vcmask 1041408
    %v650 = vsel %vm649, %v644, -inf
    %651 = vmax.xlane.f32.xlu0 %v650
    %v652 = vpop.xlane.xlu0 %651
    %v653 = vsub.f32 %v644, %v652
    %v654 = vmul.f32 %v653, 1.442695
    %v655 = vpow.pop %v654
    %v656 = vsel %vm649, %v655, 0.0
    %657 = vadd.xlane.f32.xlu0 %v656
    %v658 = vpop.xlane.xlu0 %657
    %v659 = vlog2.pop %v658
    %v660 = vmul.f32 %v659, 0.6931472
    %v661 = vsub.f32 %v653, %v660
    %662 = vst [vmem:[#allocation5] sm:$0x3] %v661
    // Predicated region
    $region18: #{mnist_forward.1} parent=1 // pred_check
      _
    $region19: #{mnist_forward.1} parent=1 // pred_check_branch
      %664 = sbr.rel (0) target = $region21
    $region20: #{mnist_forward.1} parent=1 // pred_region
      %s666 = ssub.s32 32, 32
      %667 = vsyncadd [#allocation4], %s666
      %s669 = sshll.u32 [#allocation5], 4
      %s670 = int_to_ptr.vmem [resolvable:$true] %s669
      %672 = dma.vmem_to_hbm [thread:$0]  %s670, 32, %s3, [#allocation4]
    $region21: #{mnist_forward.1} parent=1 // pred_fallthru
      _
    // Predicated region
    $region22: #{mnist_forward.1} parent=1 // pred_check
      _
    $region23: #{mnist_forward.1} parent=1 // pred_check_branch
      %674 = sbr.rel (0) target = $region25
    $region24: #{mnist_forward.1} parent=1 // pred_region
      %675 = dma.done [#allocation4], 32
    $region25: #{mnist_forward.1} parent=1 // pred_fallthru
      _
    %676 = vsyncpa [#allocation3], 1
    %677 = vsyncpa [#allocation4], 1

</llo_original>
